<compile_context>
chip_gen: v6e
topology: v6e:2x2x1
jax: 0.10.0
libtpu: 0.0.40
codegen_flags: <defaults>
</compile_context>

<pallas_src>
import functools

import jax
import jax.numpy as jnp
import numpy as np
from jax.experimental import pallas as pl
from jax.experimental.pallas import tpu as pltpu


# ------------------------------- Pallas kernel --------------------------------

def _oned_kernel(x_ref, r_ref, b_ref, o_ref, *, K, pad):
    """out = im2col_H(x) @ R + bias  (all directional convs in a single dot).

    x_ref : [bb, H, W*C]    bf16  channels-last rows flattened onto lanes
    r_ref : [K*W*C, W*NF]   bf16  banded-Toeplitz weights (H + V + diag, 1x1 folded)
    b_ref : [1, W*NF]       f32   fused bias row (bias tiled over w)
    o_ref : [bb, H, W*NF]   f32   lane-dense output slab
    """
    bb, H, WC = x_ref.shape
    # layout work (pad / shift / concat) in f32: safe on v5e, cast before dot
    x = x_ref[...].astype(jnp.float32)
    z = jnp.zeros((bb, pad, WC), jnp.float32)
    xp = jnp.concatenate([z, x, z], axis=1)                 # [bb, H+2p, WC]
    # row-shift im2col: K slabs, each a full (lane-dense) [bb, H, WC] slice
    lhs = jnp.concatenate([xp[:, k:k + H, :] for k in range(K)], axis=-1)
    lhs = lhs.reshape(bb * H, K * WC).astype(r_ref.dtype)   # [bb*H, K*WC] bf16
    acc = jnp.dot(lhs, r_ref[...], preferred_element_type=jnp.float32)
    acc = acc + b_ref[...]                                   # broadcast [1, W*NF]
    o_ref[...] = acc.reshape(bb, H, -1).astype(o_ref.dtype)


def _oned_matmul(x, R, bias_row, *, K):
    """x: [B, H, W*C] bf16, R: [K*W*C, W*NF] bf16, bias_row: [1, W*NF] f32."""
    B, H, WC = x.shape
    KWC, WNF = R.shape
    pad = (K - 1) // 2
    # whole batch per grid step while the im2col working set stays small
    # TODO(synk): re-tile H with a K-1 halo (and raise vmem_limit_bytes) once
    #             B*H*W*C grows past a few MiB -- needed for v7x's 64 MiB VMEM
    #             / 2 TCs and v5e's 16 MiB scoped default.
    bb = B if B * H * (K + 2) * WC * 4 <= (4 << 20) else 1
    kernel = functools.partial(_oned_kernel, K=K, pad=pad)
    return pl.pallas_call(
        kernel,
        out_shape=jax.ShapeDtypeStruct((B, H, WNF), jnp.float32),
        grid=(B // bb,),
        in_specs=[
            pl.BlockSpec((bb, H, WC), lambda i: (i, 0, 0)),
            pl.BlockSpec((KWC, WNF), lambda i: (0, 0)),
            pl.BlockSpec((1, WNF), lambda i: (0, 0)),
        ],
        out_specs=pl.BlockSpec((bb, H, WNF), lambda i: (i, 0, 0)),
        compiler_params=pltpu.CompilerParams(
            dimension_semantics=("parallel",)),
    )(x, R, bias_row)


# ----------------------- Toeplitz RHS built in the wrapper --------------------

def _build_toeplitz_rhs(wh, wv, wd, W):
    """Banded RHS [K*W*C, W*NF] packing horizontal / vertical / diagonal taps.

    wh, wv, wd : [K, C, NF] folded taps.  LHS row block k holds x[h - pad + k];
    RHS row index = k*(W*C) + w_src*C + c, column index = w_dst*NF + f.
    Band truncation at the matrix edges == the convs' zero padding along W.
    """
    K, C, NF = wv.shape
    pad = (K - 1) // 2
    ws = jnp.arange(W)
    # vertical conv: same column, every row-tap k
    same_col = (ws[:, None] == ws[None, :]).astype(jnp.float32)           # [Ws, Wd]
    R = jnp.einsum('kcf,sd->kscdf', wv, same_col)
    # diagonal conv: source col = dst col + pad - k, every row-tap k
    diag_col = (ws[None, :, None]
                == ws[None, None, :] + pad - jnp.arange(K)[:, None, None]
                ).astype(jnp.float32)                                      # [K, Ws, Wd]
    R = R + jnp.einsum('kcf,ksd->kscdf', wd, diag_col)
    # horizontal conv: row-tap k == pad only, tap index j = w_src - w_dst + pad
    j = ws[:, None] - ws[None, :] + pad                                    # [Ws, Wd]
    band = jnp.where(((j >= 0) & (j < K))[:, :, None, None],
                     wh[jnp.clip(j, 0, K - 1)], 0.0)                       # [Ws, Wd, C, NF]
    R = R.at[pad].add(jnp.transpose(band, (0, 2, 1, 3)))
    return R.reshape(K * W * C, W * NF)


# ------------------------------ forward (Pallas) ------------------------------

def oned_block_forward(x_nchw, params):
    w1, b1, w2, b2, w3, b3, w4, b4, w5, b5 = params
    B, C, H, W = x_nchw.shape
    assert H == W, "OneD_Block's shear transforms require square input"
    assert C % 4 == 0
    NF = w5.shape[0]
    K = w1.shape[-1]
    c12, c34 = C // 2, C // 4

    # ---- fold the trailing 1x1 conv into per-direction taps [K, C, NF] ----
    W5 = w5[:, :, 0, 0]                                     # [NF, C + C//2]
    s1, s2 = W5[:, :c12], W5[:, c12:2 * c12]
    s3, s4 = W5[:, 2 * c12:2 * c12 + c34], W5[:, 2 * c12 + c34:]
    wh = jnp.einsum('fo,ock->kcf', s1, w1[:, :, 0, :])      # (1,9): conv along W
    wv = jnp.einsum('fo,ock->kcf', s2, w2[:, :, :, 0])      # (9,1): conv along H
    w3f = jnp.einsum('fo,ock->kcf', s3, w3[:, :, :, 0])     # sheared branch 3
    w4f = jnp.einsum('fo,ock->kcf', s4, w4[:, :, 0, :])     # sheared branch 4
    wd = w3f + w4f[::-1]            # both branches == one anti-diagonal conv
    bf = b5 + s1 @ b1 + s2 @ b2 + s3 @ b3 + s4 @ b4         # fused bias [NF]

    R = _build_toeplitz_rhs(wh, wv, wd, W).astype(jnp.bfloat16)
    bias_row = jnp.tile(bf, W).reshape(1, W * NF).astype(jnp.float32)

    # channels-last, lanes = W*C, bf16 for HBM + MXU (single relayout in XLA)
    x = jnp.transpose(x_nchw, (0, 2, 3, 1)).reshape(B, H, W * C)
    x = x.astype(jnp.bfloat16)

    out = _oned_matmul(x, R, bias_row, K=K)                  # [B, H, W*NF] f32
    out = out.reshape(B, H, W, NF)
    return jnp.transpose(out, (0, 3, 1, 2)).astype(x_nchw.dtype)


# ---------------------------- pure-JAX reference ------------------------------

def _swap_hw(x):
    return jnp.transpose(x, (0, 1, 3, 2))


def h_transform_nchw(x):
    B, C, H, W = x.shape
    x = jnp.pad(x, ((0, 0), (0, 0), (0, 0), (0, W)))
    x = x.reshape(B, C, -1)[..., :-W]
    return x.reshape(B, C, H, 2 * W - 1)


def inv_h_transform_nchw(x):
    B, C, H, _ = x.shape
    x = x.reshape(B, C, -1)
    x = jnp.pad(x, ((0, 0), (0, 0), (0, H)))
    x = x.reshape(B, C, H, 2 * H)
    return x[..., :H]


def v_transform_nchw(x):
    x = _swap_hw(x)
    B, C, W, H = x.shape
    x = jnp.pad(x, ((0, 0), (0, 0), (0, 0), (0, H)))
    x = x.reshape(B, C, -1)[..., :-H]
    x = x.reshape(B, C, W, 2 * H - 1)
    return _swap_hw(x)


def inv_v_transform_nchw(x):
    x = _swap_hw(x)
    B, C, W, _ = x.shape
    x = x.reshape(B, C, -1)
    x = jnp.pad(x, ((0, 0), (0, 0), (0, W)))
    x = x.reshape(B, C, W, 2 * W)
    x = x[..., :W]
    return _swap_hw(x)


def _conv2d_ref(x, w, b, pad_hw):
    out = jax.lax.conv_general_dilated(
        x, w, window_strides=(1, 1),
        padding=((pad_hw[0], pad_hw[0]), (pad_hw[1], pad_hw[1])),
        dimension_numbers=('NCHW', 'OIHW', 'NCHW'))
    return out + b.reshape(1, -1, 1, 1)


def oned_block_ref(x, params):
    w1, b1, w2, b2, w3, b3, w4, b4, w5, b5 = params
    x1 = _conv2d_ref(x, w1, b1, (0, 4))
    x2 = _conv2d_ref(x, w2, b2, (4, 0))
    x3 = inv_h_transform_nchw(_conv2d_ref(h_transform_nchw(x), w3, b3, (4, 0)))
    x4 = inv_v_transform_nchw(_conv2d_ref(v_transform_nchw(x), w4, b4, (0, 4)))
    xcat = jnp.concatenate([x1, x2, x3, x4], axis=1)
    return _conv2d_ref(xcat, w5, b5, (0, 0))


# ------------------------------------ main -------------------------------------

if __name__ == "__main__":
    B, C, H, W = 2, 8, 16, 16          # H == W required by the h/v transforms
    n_filters = 8                      # W*C = W*NF = 128 -> lane-dense tiles

    key = jax.random.PRNGKey(0)
    ks = jax.random.split(key, 11)

    def init(k, shape):
        return (0.1 * jax.random.normal(k, shape)).astype(jnp.float32)

    params = (
        init(ks[0], (C // 2, C, 1, 9)), init(ks[1], (C // 2,)),          # deconv1
        init(ks[2], (C // 2, C, 9, 1)), init(ks[3], (C // 2,)),          # deconv2
        init(ks[4], (C // 4, C, 9, 1)), init(ks[5], (C // 4,)),          # deconv3
        init(ks[6], (C // 4, C, 1, 9)), init(ks[7], (C // 4,)),          # deconv4
        init(ks[8], (n_filters, C + C // 2, 1, 1)), init(ks[9], (n_filters,)),  # conv3
    )
    x = jax.random.normal(ks[10], (B, C, H, W), jnp.float32)

    fwd = jax.jit(oned_block_forward)
    out = jax.block_until_ready(fwd(x, params))
    assert out.shape == (B, n_filters, H, W), out.shape

    ref = jax.block_until_ready(oned_block_ref(x, params))
    np.testing.assert_allclose(np.asarray(out), np.asarray(ref),
                               atol=5e-2, rtol=5e-2)

    print("KERNEL_OK")
</pallas_src>

<mosaic_0001>
module attributes {stable_mosaic.version = 11 : i64} {
  func.func @_oned_kernel(%arg0: i32, %arg1: memref<2x16x128xbf16, #tpu.memory_space<vmem>>, %arg2: memref<1152x128xbf16, #tpu.memory_space<vmem>>, %arg3: memref<1x128xf32, #tpu.memory_space<vmem>>, %arg4: memref<2x16x128xf32, #tpu.memory_space<vmem>>) attributes {dimension_semantics = [#tpu.dimension_semantics<parallel>], iteration_bounds = array<i64: 1>, scalar_prefetch = 0 : i64, scratch_operands = 0 : i64, tpu.core_type = #tpu.core_type<tc>, window_params = [{transform_indices = @transform_0, window_bounds = array<i64: 2, 16, 128>}, {pipeline_mode = #tpu.pipeline_mode<synchronous>, transform_indices = @transform_1, window_bounds = array<i64: 1152, 128>}, {pipeline_mode = #tpu.pipeline_mode<synchronous>, transform_indices = @transform_2, window_bounds = array<i64: 1, 128>}, {transform_indices = @transform_3, window_bounds = array<i64: 2, 16, 128>}]} {
    %c0 = arith.constant 0 : index
    %c0_0 = arith.constant 0 : index
    %c0_1 = arith.constant 0 : index
    %0 = vector.load %arg1[%c0, %c0_0, %c0_1] : memref<2x16x128xbf16, #tpu.memory_space<vmem>>, vector<2x16x128xbf16>
    %1 = arith.extf %0 : vector<2x16x128xbf16> to vector<2x16x128xf32>
    %cst = arith.constant 0.000000e+00 : f32
    %2 = vector.broadcast %cst : f32 to vector<2x4x128xf32>
    %3 = tpu.concatenate %2, %1, %2 in 1 : vector<2x4x128xf32>, vector<2x16x128xf32>, vector<2x4x128xf32> -> vector<2x24x128xf32>
    %4 = vector.extract_strided_slice %3 {offsets = [0, 0, 0], sizes = [2, 16, 128], strides = [1, 1, 1]} : vector<2x24x128xf32> to vector<2x16x128xf32>
    %5 = vector.extract_strided_slice %3 {offsets = [0, 1, 0], sizes = [2, 16, 128], strides = [1, 1, 1]} : vector<2x24x128xf32> to vector<2x16x128xf32>
    %6 = vector.extract_strided_slice %3 {offsets = [0, 2, 0], sizes = [2, 16, 128], strides = [1, 1, 1]} : vector<2x24x128xf32> to vector<2x16x128xf32>
    %7 = vector.extract_strided_slice %3 {offsets = [0, 3, 0], sizes = [2, 16, 128], strides = [1, 1, 1]} : vector<2x24x128xf32> to vector<2x16x128xf32>
    %8 = vector.extract_strided_slice %3 {offsets = [0, 4, 0], sizes = [2, 16, 128], strides = [1, 1, 1]} : vector<2x24x128xf32> to vector<2x16x128xf32>
    %9 = vector.extract_strided_slice %3 {offsets = [0, 5, 0], sizes = [2, 16, 128], strides = [1, 1, 1]} : vector<2x24x128xf32> to vector<2x16x128xf32>
    %10 = vector.extract_strided_slice %3 {offsets = [0, 6, 0], sizes = [2, 16, 128], strides = [1, 1, 1]} : vector<2x24x128xf32> to vector<2x16x128xf32>
    %11 = vector.extract_strided_slice %3 {offsets = [0, 7, 0], sizes = [2, 16, 128], strides = [1, 1, 1]} : vector<2x24x128xf32> to vector<2x16x128xf32>
    %12 = vector.extract_strided_slice %3 {offsets = [0, 8, 0], sizes = [2, 16, 128], strides = [1, 1, 1]} : vector<2x24x128xf32> to vector<2x16x128xf32>
    %13 = tpu.concatenate %4, %5, %6, %7, %8, %9, %10, %11, %12 in 2 : vector<2x16x128xf32>, vector<2x16x128xf32>, vector<2x16x128xf32>, vector<2x16x128xf32>, vector<2x16x128xf32>, vector<2x16x128xf32>, vector<2x16x128xf32>, vector<2x16x128xf32>, vector<2x16x128xf32> -> vector<2x16x1152xf32>
    %14 = vector.shape_cast %13 : vector<2x16x1152xf32> to vector<32x1152xf32>
    %15 = arith.truncf %14 : vector<32x1152xf32> to vector<32x1152xbf16>
    %c0_2 = arith.constant 0 : index
    %c0_3 = arith.constant 0 : index
    %16 = vector.load %arg2[%c0_2, %c0_3] : memref<1152x128xbf16, #tpu.memory_space<vmem>>, vector<1152x128xbf16>
    %cst_4 = arith.constant dense<0.000000e+00> : vector<32x128xf32>
    %17 = tpu.matmul %15, %16, %cst_4 {dimension_numbers = #tpu.dot_dimension_numbers<[1], [0], [0], [1], [0, 0, 1, 1], [], []>} : vector<32x1152xbf16>, vector<1152x128xbf16>, vector<32x128xf32> -> vector<32x128xf32>
    %c0_5 = arith.constant 0 : index
    %c0_6 = arith.constant 0 : index
    %18 = vector.load %arg3[%c0_5, %c0_6] : memref<1x128xf32, #tpu.memory_space<vmem>>, vector<1x128xf32>
    %19 = vector.broadcast %18 : vector<1x128xf32> to vector<32x128xf32>
    %20 = arith.addf %17, %19 : vector<32x128xf32>
    %21 = vector.shape_cast %20 : vector<32x128xf32> to vector<2x16x128xf32>
    %c0_7 = arith.constant 0 : index
    %c0_8 = arith.constant 0 : index
    %c0_9 = arith.constant 0 : index
    %22 = vector.load %arg4[%c0_7, %c0_8, %c0_9] : memref<2x16x128xf32, #tpu.memory_space<vmem>>, vector<2x16x128xf32>
    tpu.vector_store %arg4[%c0_7, %c0_8, %c0_9], %21 {strides = array<i32>} : memref<2x16x128xf32, #tpu.memory_space<vmem>>, vector<2x16x128xf32>,
    return
  }
  func.func @transform_0(%arg0: i32) -> (i32, i32, i32) {
    %c0_i32 = arith.constant 0 : i32
    %c0_i32_0 = arith.constant 0 : i32
    %c0_i32_1 = arith.constant 0 : i32
    return %arg0, %c0_i32, %c0_i32_0 : i32, i32, i32
  }
  func.func @transform_1(%arg0: i32) -> (i32, i32) {
    %c0_i32 = arith.constant 0 : i32
    %c0_i32_0 = arith.constant 0 : i32
    %c0_i32_1 = arith.constant 0 : i32
    return %c0_i32, %c0_i32_0 : i32, i32
  }
  func.func @transform_2(%arg0: i32) -> (i32, i32) {
    %c0_i32 = arith.constant 0 : i32
    %c0_i32_0 = arith.constant 0 : i32
    %c0_i32_1 = arith.constant 0 : i32
    return %c0_i32, %c0_i32_0 : i32, i32
  }
  func.func @transform_3(%arg0: i32) -> (i32, i32, i32) {
    %c0_i32 = arith.constant 0 : i32
    %c0_i32_0 = arith.constant 0 : i32
    %c0_i32_1 = arith.constant 0 : i32
    return %arg0, %c0_i32, %c0_i32_0 : i32, i32, i32
  }
}

</mosaic_0001>

<llo_original>
// kernel: tile.8
$region0: #{tile.8}
  #allocation0 [shape = 's32[1]{0}', space=sflag, size = 0x4, scoped, tag = 'scoped memory for tile.8']
  %s0 = inlined_call_operand.vmem [shape: f32[8], index: 0, kind: input, shape index: {}]
  %s1 = inlined_call_operand.vmem [shape: f32[16,8], index: 1, kind: output, shape index: {}]
  // Predicated region
  $region2: #{tile.8} parent=0 // pred_check
    _
  $region3: #{tile.8} parent=0 // pred_check_branch
    %3 = sbr.rel (0) target = $region5
  $region4: #{tile.8} parent=0 // pred_region
    _
  $region5: #{tile.8} parent=0 // pred_fallthru
    _
  %v4 = vld [vmem:[%s0] ss:$0 sm:$0xff]
  %5 = vst [vmem:[%s1] sm:$0xff] %v4
  %s6 = scalar_lea.vmem %s1, 8
  %7 = vst [vmem:[%s6] sm:$0xff] %v4

// kernel: tile.9
$region0: #{tile.9}
  %s0 = inlined_call_operand.vmem [shape: f32[16,8], index: 0, kind: input, shape index: {}]
  %s1 = inlined_call_operand.vmem [shape: f32[1,128], index: 1, kind: output, shape index: {}]
  $region1: #{tile.9} parent=0
    #allocation0 [shape = 'u8[4096]{0}', space=vmem, size = 0x1000, scoped, tag = 'scoped mem for output reshape']
    %v2 = vld [vmem:[%s0] sm:$0x1]
    %vm3 = vcmask 64512
    %4 = vst.msk [vmem:[#allocation0] sm:$0x1] %vm3, %v2
    %s5 = scalar_lea.vmem %s0, 15
    %v6 = vld [vmem:[%s5] sm:$0x1]
    %7 = vrot.lane.b32.xlu0 %v6, 120
    %v8 = vpop.permute.xlu0 %7
    %vm9 = vcmask 1048512
    %10 = vst.msk [vmem:[#allocation0] sm:$0x1] %vm9, %v8
    %s11 = scalar_lea.vmem %s0, 14
    %v12 = vld [vmem:[%s11] sm:$0x1]
    %13 = vrot.lane.b32.xlu0 %v12, 112
    %v14 = vpop.permute.xlu0 %13
    %vm15 = vcmask 982912
    %16 = vst.msk [vmem:[#allocation0] sm:$0x1] %vm15, %v14
    %s17 = scalar_lea.vmem %s0, 13
    %v18 = vld [vmem:[%s17] sm:$0x1]
    %19 = vrot.lane.b32.xlu0 %v18, 104
    %v20 = vpop.permute.xlu0 %19
    %vm21 = vcmask 917312
    %22 = vst.msk [vmem:[#allocation0] sm:$0x1] %vm21, %v20
    %s23 = scalar_lea.vmem %s0, 12
    %v24 = vld [vmem:[%s23] sm:$0x1]
    %25 = vrot.lane.b32.xlu0 %v24, 96
    %v26 = vpop.permute.xlu0 %25
    %vm27 = vcmask 851712
    %28 = vst.msk [vmem:[#allocation0] sm:$0x1] %vm27, %v26
    %s29 = scalar_lea.vmem %s0, 11
    %v30 = vld [vmem:[%s29] sm:$0x1]
    %31 = vrot.lane.b32.xlu0 %v30, 88
    %v32 = vpop.permute.xlu0 %31
    %vm33 = vcmask 786112
    %34 = vst.msk [vmem:[#allocation0] sm:$0x1] %vm33, %v32
    %s35 = scalar_lea.vmem %s0, 10
    %v36 = vld [vmem:[%s35] sm:$0x1]
    %37 = vrot.lane.b32.xlu0 %v36, 80
    %v38 = vpop.permute.xlu0 %37
    %vm39 = vcmask 720512
    %40 = vst.msk [vmem:[#allocation0] sm:$0x1] %vm39, %v38
    %s41 = scalar_lea.vmem %s0, 9
    %v42 = vld [vmem:[%s41] sm:$0x1]
    %43 = vrot.lane.b32.xlu0 %v42, 72
    %v44 = vpop.permute.xlu0 %43
    %vm45 = vcmask 654912
    %46 = vst.msk [vmem:[#allocation0] sm:$0x1] %vm45, %v44
    %s47 = scalar_lea.vmem %s0, 8
    %v48 = vld [vmem:[%s47] sm:$0x1]
    %49 = vrot.lane.b32.xlu0 %v48, 64
    %v50 = vpop.permute.xlu0 %49
    %vm51 = vcmask 589312
    %52 = vst.msk [vmem:[#allocation0] sm:$0x1] %vm51, %v50
    %s53 = scalar_lea.vmem %s0, 7
    %v54 = vld [vmem:[%s53] sm:$0x1]
    %55 = vrot.lane.b32.xlu0 %v54, 56
    %v56 = vpop.permute.xlu0 %55
    %vm57 = vcmask 523712
    %58 = vst.msk [vmem:[#allocation0] sm:$0x1] %vm57, %v56
    %s59 = scalar_lea.vmem %s0, 6
    %v60 = vld [vmem:[%s59] sm:$0x1]
    %61 = vrot.lane.b32.xlu0 %v60, 48
    %v62 = vpop.permute.xlu0 %61
    %vm63 = vcmask 458112
    %64 = vst.msk [vmem:[#allocation0] sm:$0x1] %vm63, %v62
    %s65 = scalar_lea.vmem %s0, 5
    %v66 = vld [vmem:[%s65] sm:$0x1]
    %67 = vrot.lane.b32.xlu0 %v66, 40
    %v68 = vpop.permute.xlu0 %67
    %vm69 = vcmask 392512
    %70 = vst.msk [vmem:[#allocation0] sm:$0x1] %vm69, %v68
    %s71 = scalar_lea.vmem %s0, 4
    %v72 = vld [vmem:[%s71] sm:$0x1]
    %73 = vrot.lane.b32.xlu0 %v72, 32
    %v74 = vpop.permute.xlu0 %73
    %vm75 = vcmask 326912
    %76 = vst.msk [vmem:[#allocation0] sm:$0x1] %vm75, %v74
    %s77 = scalar_lea.vmem %s0, 3
    %v78 = vld [vmem:[%s77] sm:$0x1]
    %79 = vrot.lane.b32.xlu0 %v78, 24
    %v80 = vpop.permute.xlu0 %79
    %vm81 = vcmask 261312
    %82 = vst.msk [vmem:[#allocation0] sm:$0x1] %vm81, %v80
    %s83 = scalar_lea.vmem %s0, 2
    %v84 = vld [vmem:[%s83] sm:$0x1]
    %85 = vrot.lane.b32.xlu0 %v84, 16
    %v86 = vpop.permute.xlu0 %85
    %vm87 = vcmask 195712
    %88 = vst.msk [vmem:[#allocation0] sm:$0x1] %vm87, %v86
    %s89 = scalar_lea.vmem %s0, 1
    %v90 = vld [vmem:[%s89] sm:$0x1]
    %91 = vrot.lane.b32.xlu0 %v90, 8
    %v92 = vpop.permute.xlu0 %91
    %vm93 = vcmask 130112
    %94 = vst.msk [vmem:[#allocation0] sm:$0x1] %vm93, %v92
    %s96 = sshll.u32 1, 1
    %s97 = ssub.s32 %s96, 1
    %v99 = vld [vmem:[#allocation0] sm:%s97]
    %s100 = sshll.u32 1, 1
    %s101 = ssub.s32 %s100, 1
    %102 = vst [vmem:[%s1] sm:%s101] %v99

// kernel: oned_block_forward.1
$region0: #{oned_block_forward.1}
  #allocation0 [shape = 'u32[]', space=smem, size = 0x4, offset = 0x4, fixed_abs, tag = 'smem constant byte address 0x4 - core index']
  #allocation1 [shape = 'u32[144,128]{1,0:T(1,128)}', space=vmem, size = 0x12000, scoped, tag = 'internal scratch']
  %s0 = inlined_call_operand.vmem [shape: bf16[2,16,128], index: 0, kind: input, shape index: {}]
  %s1 = inlined_call_operand.vmem [shape: bf16[1152,128], index: 1, kind: input, shape index: {}]
  %s2 = inlined_call_operand.vmem [shape: f32[1,128], index: 2, kind: input, shape index: {}]
  %s3 = inlined_call_operand.vmem [shape: f32[2,16,128], index: 3, kind: output, shape index: {}]
  %s4 = sld [smem:[#allocation0]]
  $region22: #{oned_block_forward.1} parent=0
    _
  %s6 = ssub.s32 1, %s4
  %s7 = scalar_select 0, %s6, %s4
  // Predicated region
  $region2: #{oned_block_forward.1} parent=0 // pred_check
    _
  $region3: #{oned_block_forward.1} parent=0 // pred_check_branch
    %9 = sbr.rel (0) target = $region5
  $region4: #{oned_block_forward.1} parent=0 // pred_region
    _
  $region5: #{oned_block_forward.1} parent=0 // pred_fallthru
    _
  // Predicated region
  $region6: #{oned_block_forward.1} parent=0 // pred_check
    _
  $region7: #{oned_block_forward.1} parent=0 // pred_check_branch
    %11 = sbr.rel (0) target = $region9
  $region8: #{oned_block_forward.1} parent=0 // pred_region
    _
  $region9: #{oned_block_forward.1} parent=0 // pred_fallthru
    _
  // Predicated region
  $region10: #{oned_block_forward.1} parent=0 // pred_check
    _
  $region11: #{oned_block_forward.1} parent=0 // pred_check_branch
    %13 = sbr.rel (0) target = $region13
  $region12: #{oned_block_forward.1} parent=0 // pred_region
    _
  $region13: #{oned_block_forward.1} parent=0 // pred_fallthru
    _
  %v15 = vld [vmem:[%s0] sm:$0xf]
  %v16 = vld [vmem:[%s0 + $0x4] sm:$0xf]
  %v17 = vld [vmem:[%s0 + $0x8] sm:$0xf]
  %v18 = vld [vmem:[%s0 + $0xc] sm:$0xf]
  %v19 = vunpack.c.l.bf16 %v15
  %v20 = vunpack.c.l.bf16 %v16
  %v21 = vunpack.c.l.bf16 %v17
  %v22 = vunpack.c.l.bf16 %v18
  %vm27 = vcmask 1043456
  %v28 = vrot.slane %v19, 4
  %v29 = vrot.slane %v20, 4
  %v30 = vsel %vm27, %v28, %v29
  %v31 = vrot.slane %v21, 4
  %v32 = vrot.slane %v22, 4
  %v33 = vsel %vm27, %v31, %v32
  %v40 = vsel %vm27, 0.0, %v28
  %v41 = vsel %vm27, 0.0, %v31
  %v42 = vsel %vm27, %v29, 0.0
  %v43 = vsel %vm27, %v32, 0.0
  %vm48 = vcmask 1046528
  %v49 = vrot.slane %v40, 1
  %v50 = vrot.slane %v30, 1
  %v51 = vsel %vm48, %v49, %v50
  %v52 = vrot.slane %v42, 1
  %v53 = vsel %vm48, %v50, %v52
  %v54 = vrot.slane %v41, 1
  %v55 = vrot.slane %v33, 1
  %v56 = vsel %vm48, %v54, %v55
  %v57 = vrot.slane %v43, 1
  %v58 = vsel %vm48, %v55, %v57
  %vm63 = vcmask 1045504
  %v64 = vrot.slane %v40, 2
  %v65 = vrot.slane %v30, 2
  %v66 = vsel %vm63, %v64, %v65
  %v67 = vrot.slane %v42, 2
  %v68 = vsel %vm63, %v65, %v67
  %v69 = vrot.slane %v41, 2
  %v70 = vrot.slane %v33, 2
  %v71 = vsel %vm63, %v69, %v70
  %v72 = vrot.slane %v43, 2
  %v73 = vsel %vm63, %v70, %v72
  %vm78 = vcmask 1044480
  %v79 = vrot.slane %v40, 3
  %v80 = vrot.slane %v30, 3
  %v81 = vsel %vm78, %v79, %v80
  %v82 = vrot.slane %v42, 3
  %v83 = vsel %vm78, %v80, %v82
  %v84 = vrot.slane %v41, 3
  %v85 = vrot.slane %v33, 3
  %v86 = vsel %vm78, %v84, %v85
  %v87 = vrot.slane %v43, 3
  %v88 = vsel %vm78, %v85, %v87
  %v93 = vrot.slane %v40, 4
  %v94 = vrot.slane %v30, 4
  %v95 = vsel %vm27, %v93, %v94
  %v96 = vrot.slane %v42, 4
  %v97 = vsel %vm27, %v94, %v96
  %v98 = vrot.slane %v41, 4
  %v99 = vrot.slane %v33, 4
  %v100 = vsel %vm27, %v98, %v99
  %v101 = vrot.slane %v43, 4
  %v102 = vsel %vm27, %v99, %v101
  %vm107 = vcmask 1042432
  %v108 = vrot.slane %v40, 5
  %v109 = vrot.slane %v30, 5
  %v110 = vsel %vm107, %v108, %v109
  %v111 = vrot.slane %v42, 5
  %v112 = vsel %vm107, %v109, %v111
  %v113 = vrot.slane %v41, 5
  %v114 = vrot.slane %v33, 5
  %v115 = vsel %vm107, %v113, %v114
  %v116 = vrot.slane %v43, 5
  %v117 = vsel %vm107, %v114, %v116
  %vm122 = vcmask 1041408
  %v123 = vrot.slane %v40, 6
  %v124 = vrot.slane %v30, 6
  %v125 = vsel %vm122, %v123, %v124
  %v126 = vrot.slane %v42, 6
  %v127 = vsel %vm122, %v124, %v126
  %v128 = vrot.slane %v41, 6
  %v129 = vrot.slane %v33, 6
  %v130 = vsel %vm122, %v128, %v129
  %v131 = vrot.slane %v43, 6
  %v132 = vsel %vm122, %v129, %v131
  %vm137 = vcmask 1040384
  %v138 = vrot.slane %v40, 7
  %v139 = vrot.slane %v30, 7
  %v140 = vsel %vm137, %v138, %v139
  %v141 = vrot.slane %v42, 7
  %v142 = vsel %vm137, %v139, %v141
  %v143 = vrot.slane %v41, 7
  %v144 = vrot.slane %v33, 7
  %v145 = vsel %vm137, %v143, %v144
  %v146 = vrot.slane %v43, 7
  %v147 = vsel %vm137, %v144, %v146
  %v152 = vpack.c.bf16 %v30, %v40
  %v153 = vpack.c.bf16 %v53, %v51
  %v154 = vpack.c.bf16 %v68, %v66
  %v155 = vpack.c.bf16 %v83, %v81
  %v156 = vpack.c.bf16 %v97, %v95
  %v157 = vpack.c.bf16 %v112, %v110
  %v158 = vpack.c.bf16 %v127, %v125
  %v159 = vpack.c.bf16 %v142, %v140
  %v160 = vpack.c.bf16 %v42, %v30
  %v161 = vpack.c.bf16 %v33, %v41
  %v162 = vpack.c.bf16 %v58, %v56
  %v163 = vpack.c.bf16 %v73, %v71
  %v164 = vpack.c.bf16 %v88, %v86
  %v165 = vpack.c.bf16 %v102, %v100
  %v166 = vpack.c.bf16 %v117, %v115
  %v167 = vpack.c.bf16 %v132, %v130
  %v168 = vpack.c.bf16 %v147, %v145
  %v169 = vpack.c.bf16 %v43, %v33
  %v170 = vld [vmem:[%s1] sm:$0xf]
  %v171 = vld [vmem:[%s1 + $0x4] sm:$0xf]
  %v172 = vld [vmem:[%s1 + $0x8] sm:$0xf]
  %v173 = vld [vmem:[%s1 + $0xc] sm:$0xf]
  %v174 = vld [vmem:[%s1 + $0x10] sm:$0xf]
  %v175 = vld [vmem:[%s1 + $0x14] sm:$0xf]
  %v176 = vld [vmem:[%s1 + $0x18] sm:$0xf]
  %v177 = vld [vmem:[%s1 + $0x1c] sm:$0xf]
  %v178 = vld [vmem:[%s1 + $0x20] sm:$0xf]
  %v179 = vld [vmem:[%s1 + $0x24] sm:$0xf]
  %v180 = vld [vmem:[%s1 + $0x28] sm:$0xf]
  %v181 = vld [vmem:[%s1 + $0x2c] sm:$0xf]
  %v182 = vld [vmem:[%s1 + $0x30] sm:$0xf]
  %v183 = vld [vmem:[%s1 + $0x34] sm:$0xf]
  %v184 = vld [vmem:[%s1 + $0x38] sm:$0xf]
  %v185 = vld [vmem:[%s1 + $0x3c] sm:$0xf]
  %v186 = vld [vmem:[%s1 + $0x40] sm:$0xf]
  %v187 = vld [vmem:[%s1 + $0x44] sm:$0xf]
  %v188 = vld [vmem:[%s1 + $0x48] sm:$0xf]
  %v189 = vld [vmem:[%s1 + $0x4c] sm:$0xf]
  %v190 = vld [vmem:[%s1 + $0x50] sm:$0xf]
  %v191 = vld [vmem:[%s1 + $0x54] sm:$0xf]
  %v192 = vld [vmem:[%s1 + $0x58] sm:$0xf]
  %v193 = vld [vmem:[%s1 + $0x5c] sm:$0xf]
  %v194 = vld [vmem:[%s1 + $0x60] sm:$0xf]
  %v195 = vld [vmem:[%s1 + $0x64] sm:$0xf]
  %v196 = vld [vmem:[%s1 + $0x68] sm:$0xf]
  %v197 = vld [vmem:[%s1 + $0x6c] sm:$0xf]
  %v198 = vld [vmem:[%s1 + $0x70] sm:$0xf]
  %v199 = vld [vmem:[%s1 + $0x74] sm:$0xf]
  %v200 = vld [vmem:[%s1 + $0x78] sm:$0xf]
  %v201 = vld [vmem:[%s1 + $0x7c] sm:$0xf]
  %v202 = vld [vmem:[%s1 + $0x80] sm:$0xf]
  %v203 = vld [vmem:[%s1 + $0x84] sm:$0xf]
  %v204 = vld [vmem:[%s1 + $0x88] sm:$0xf]
  %v205 = vld [vmem:[%s1 + $0x8c] sm:$0xf]
  %v206 = vld [vmem:[%s1 + $0x90] sm:$0xf]
  %v207 = vld [vmem:[%s1 + $0x94] sm:$0xf]
  %v208 = vld [vmem:[%s1 + $0x98] sm:$0xf]
  %v209 = vld [vmem:[%s1 + $0x9c] sm:$0xf]
  %v210 = vld [vmem:[%s1 + $0xa0] sm:$0xf]
  %v211 = vld [vmem:[%s1 + $0xa4] sm:$0xf]
  %v212 = vld [vmem:[%s1 + $0xa8] sm:$0xf]
  %v213 = vld [vmem:[%s1 + $0xac] sm:$0xf]
  %v214 = vld [vmem:[%s1 + $0xb0] sm:$0xf]
  %v215 = vld [vmem:[%s1 + $0xb4] sm:$0xf]
  %v216 = vld [vmem:[%s1 + $0xb8] sm:$0xf]
  %v217 = vld [vmem:[%s1 + $0xbc] sm:$0xf]
  %v218 = vld [vmem:[%s1 + $0xc0] sm:$0xf]
  %v219 = vld [vmem:[%s1 + $0xc4] sm:$0xf]
  %v220 = vld [vmem:[%s1 + $0xc8] sm:$0xf]
  %v221 = vld [vmem:[%s1 + $0xcc] sm:$0xf]
  %v222 = vld [vmem:[%s1 + $0xd0] sm:$0xf]
  %v223 = vld [vmem:[%s1 + $0xd4] sm:$0xf]
  %v224 = vld [vmem:[%s1 + $0xd8] sm:$0xf]
  %v225 = vld [vmem:[%s1 + $0xdc] sm:$0xf]
  %v226 = vld [vmem:[%s1 + $0xe0] sm:$0xf]
  %v227 = vld [vmem:[%s1 + $0xe4] sm:$0xf]
  %v228 = vld [vmem:[%s1 + $0xe8] sm:$0xf]
  %v229 = vld [vmem:[%s1 + $0xec] sm:$0xf]
  %v230 = vld [vmem:[%s1 + $0xf0] sm:$0xf]
  %v231 = vld [vmem:[%s1 + $0xf4] sm:$0xf]
  %v232 = vld [vmem:[%s1 + $0xf8] sm:$0xf]
  %v233 = vld [vmem:[%s1 + $0xfc] sm:$0xf]
  %v234 = vld [vmem:[%s1 + $0x100] sm:$0xf]
  %v235 = vld [vmem:[%s1 + $0x104] sm:$0xf]
  %v236 = vld [vmem:[%s1 + $0x108] sm:$0xf]
  %v237 = vld [vmem:[%s1 + $0x10c] sm:$0xf]
  %v238 = vld [vmem:[%s1 + $0x110] sm:$0xf]
  %v239 = vld [vmem:[%s1 + $0x114] sm:$0xf]
  %v240 = vld [vmem:[%s1 + $0x118] sm:$0xf]
  %v241 = vld [vmem:[%s1 + $0x11c] sm:$0xf]
  %v242 = vld [vmem:[%s1 + $0x120] sm:$0xf]
  %v243 = vld [vmem:[%s1 + $0x124] sm:$0xf]
  %v244 = vld [vmem:[%s1 + $0x128] sm:$0xf]
  %v245 = vld [vmem:[%s1 + $0x12c] sm:$0xf]
  %v246 = vld [vmem:[%s1 + $0x130] sm:$0xf]
  %v247 = vld [vmem:[%s1 + $0x134] sm:$0xf]
  %v248 = vld [vmem:[%s1 + $0x138] sm:$0xf]
  %v249 = vld [vmem:[%s1 + $0x13c] sm:$0xf]
  %v250 = vld [vmem:[%s1 + $0x140] sm:$0xf]
  %v251 = vld [vmem:[%s1 + $0x144] sm:$0xf]
  %v252 = vld [vmem:[%s1 + $0x148] sm:$0xf]
  %v253 = vld [vmem:[%s1 + $0x14c] sm:$0xf]
  %v254 = vld [vmem:[%s1 + $0x150] sm:$0xf]
  %v255 = vld [vmem:[%s1 + $0x154] sm:$0xf]
  %v256 = vld [vmem:[%s1 + $0x158] sm:$0xf]
  %v257 = vld [vmem:[%s1 + $0x15c] sm:$0xf]
  %v258 = vld [vmem:[%s1 + $0x160] sm:$0xf]
  %v259 = vld [vmem:[%s1 + $0x164] sm:$0xf]
  %v260 = vld [vmem:[%s1 + $0x168] sm:$0xf]
  %v261 = vld [vmem:[%s1 + $0x16c] sm:$0xf]
  %v262 = vld [vmem:[%s1 + $0x170] sm:$0xf]
  %v263 = vld [vmem:[%s1 + $0x174] sm:$0xf]
  %v264 = vld [vmem:[%s1 + $0x178] sm:$0xf]
  %v265 = vld [vmem:[%s1 + $0x17c] sm:$0xf]
  %v266 = vld [vmem:[%s1 + $0x180] sm:$0xf]
  %v267 = vld [vmem:[%s1 + $0x184] sm:$0xf]
  %v268 = vld [vmem:[%s1 + $0x188] sm:$0xf]
  %v269 = vld [vmem:[%s1 + $0x18c] sm:$0xf]
  %v270 = vld [vmem:[%s1 + $0x190] sm:$0xf]
  %v271 = vld [vmem:[%s1 + $0x194] sm:$0xf]
  %v272 = vld [vmem:[%s1 + $0x198] sm:$0xf]
  %v273 = vld [vmem:[%s1 + $0x19c] sm:$0xf]
  %v274 = vld [vmem:[%s1 + $0x1a0] sm:$0xf]
  %v275 = vld [vmem:[%s1 + $0x1a4] sm:$0xf]
  %v276 = vld [vmem:[%s1 + $0x1a8] sm:$0xf]
  %v277 = vld [vmem:[%s1 + $0x1ac] sm:$0xf]
  %v278 = vld [vmem:[%s1 + $0x1b0] sm:$0xf]
  %v279 = vld [vmem:[%s1 + $0x1b4] sm:$0xf]
  %v280 = vld [vmem:[%s1 + $0x1b8] sm:$0xf]
  %v281 = vld [vmem:[%s1 + $0x1bc] sm:$0xf]
  %v282 = vld [vmem:[%s1 + $0x1c0] sm:$0xf]
  %v283 = vld [vmem:[%s1 + $0x1c4] sm:$0xf]
  %v284 = vld [vmem:[%s1 + $0x1c8] sm:$0xf]
  %v285 = vld [vmem:[%s1 + $0x1cc] sm:$0xf]
  %v286 = vld [vmem:[%s1 + $0x1d0] sm:$0xf]
  %v287 = vld [vmem:[%s1 + $0x1d4] sm:$0xf]
  %v288 = vld [vmem:[%s1 + $0x1d8] sm:$0xf]
  %v289 = vld [vmem:[%s1 + $0x1dc] sm:$0xf]
  %v290 = vld [vmem:[%s1 + $0x1e0] sm:$0xf]
  %v291 = vld [vmem:[%s1 + $0x1e4] sm:$0xf]
  %v292 = vld [vmem:[%s1 + $0x1e8] sm:$0xf]
  %v293 = vld [vmem:[%s1 + $0x1ec] sm:$0xf]
  %v294 = vld [vmem:[%s1 + $0x1f0] sm:$0xf]
  %v295 = vld [vmem:[%s1 + $0x1f4] sm:$0xf]
  %v296 = vld [vmem:[%s1 + $0x1f8] sm:$0xf]
  %v297 = vld [vmem:[%s1 + $0x1fc] sm:$0xf]
  %v298 = vld [vmem:[%s1 + $0x200] sm:$0xf]
  %v299 = vld [vmem:[%s1 + $0x204] sm:$0xf]
  %v300 = vld [vmem:[%s1 + $0x208] sm:$0xf]
  %v301 = vld [vmem:[%s1 + $0x20c] sm:$0xf]
  %v302 = vld [vmem:[%s1 + $0x210] sm:$0xf]
  %v303 = vld [vmem:[%s1 + $0x214] sm:$0xf]
  %v304 = vld [vmem:[%s1 + $0x218] sm:$0xf]
  %v305 = vld [vmem:[%s1 + $0x21c] sm:$0xf]
  %v306 = vld [vmem:[%s1 + $0x220] sm:$0xf]
  %v307 = vld [vmem:[%s1 + $0x224] sm:$0xf]
  %v308 = vld [vmem:[%s1 + $0x228] sm:$0xf]
  %v309 = vld [vmem:[%s1 + $0x22c] sm:$0xf]
  %v310 = vld [vmem:[%s1 + $0x230] sm:$0xf]
  %v311 = vld [vmem:[%s1 + $0x234] sm:$0xf]
  %v312 = vld [vmem:[%s1 + $0x238] sm:$0xf]
  %v313 = vld [vmem:[%s1 + $0x23c] sm:$0xf]
  %v314 = vld [vmem:[%s2] sm:$0x1]
  %v316 = vlaneseq
  %v317 = vshrl.u32 %v316, 7
  %v318 = vsub.s32 0, %v317
  %v319 = vrot.slane %v314, %v318
  %v465 = vunpack.c.l.b16 %v170
  %v466 = vunpack.c.l.b16 %v171
  %v467 = vunpack.c.l.b16 %v172
  %v468 = vunpack.c.l.b16 %v173
  %v469 = vunpack.c.l.b16 %v174
  %v470 = vunpack.c.l.b16 %v175
  %v471 = vunpack.c.l.b16 %v176
  %v472 = vunpack.c.l.b16 %v177
  %v473 = vunpack.c.l.b16 %v178
  %v474 = vunpack.c.l.b16 %v179
  %v475 = vunpack.c.l.b16 %v180
  %v476 = vunpack.c.l.b16 %v181
  %v477 = vunpack.c.l.b16 %v182
  %v478 = vunpack.c.l.b16 %v183
  %v479 = vunpack.c.l.b16 %v184
  %v480 = vunpack.c.l.b16 %v185
  %v481 = vunpack.c.l.b16 %v186
  %v482 = vunpack.c.l.b16 %v187
  %v483 = vunpack.c.l.b16 %v188
  %v484 = vunpack.c.l.b16 %v189
  %v485 = vunpack.c.l.b16 %v190
  %v486 = vunpack.c.l.b16 %v191
  %v487 = vunpack.c.l.b16 %v192
  %v488 = vunpack.c.l.b16 %v193
  %v489 = vunpack.c.l.b16 %v194
  %v490 = vunpack.c.l.b16 %v195
  %v491 = vunpack.c.l.b16 %v196
  %v492 = vunpack.c.l.b16 %v197
  %v493 = vunpack.c.l.b16 %v198
  %v494 = vunpack.c.l.b16 %v199
  %v495 = vunpack.c.l.b16 %v200
  %v496 = vunpack.c.l.b16 %v201
  %v497 = vunpack.c.l.b16 %v202
  %v498 = vunpack.c.l.b16 %v203
  %v499 = vunpack.c.l.b16 %v204
  %v500 = vunpack.c.l.b16 %v205
  %v501 = vunpack.c.l.b16 %v206
  %v502 = vunpack.c.l.b16 %v207
  %v503 = vunpack.c.l.b16 %v208
  %v504 = vunpack.c.l.b16 %v209
  %v505 = vunpack.c.l.b16 %v210
  %v506 = vunpack.c.l.b16 %v211
  %v507 = vunpack.c.l.b16 %v212
  %v508 = vunpack.c.l.b16 %v213
  %v509 = vunpack.c.l.b16 %v214
  %v510 = vunpack.c.l.b16 %v215
  %v511 = vunpack.c.l.b16 %v216
  %v512 = vunpack.c.l.b16 %v217
  %v513 = vunpack.c.l.b16 %v218
  %v514 = vunpack.c.l.b16 %v219
  %v515 = vunpack.c.l.b16 %v220
  %v516 = vunpack.c.l.b16 %v221
  %v517 = vunpack.c.l.b16 %v222
  %v518 = vunpack.c.l.b16 %v223
  %v519 = vunpack.c.l.b16 %v224
  %v520 = vunpack.c.l.b16 %v225
  %v521 = vunpack.c.l.b16 %v226
  %v522 = vunpack.c.l.b16 %v227
  %v523 = vunpack.c.l.b16 %v228
  %v524 = vunpack.c.l.b16 %v229
  %v525 = vunpack.c.l.b16 %v230
  %v526 = vunpack.c.l.b16 %v231
  %v527 = vunpack.c.l.b16 %v232
  %v528 = vunpack.c.l.b16 %v233
  %v529 = vunpack.c.l.b16 %v234
  %v530 = vunpack.c.l.b16 %v235
  %v531 = vunpack.c.l.b16 %v236
  %v532 = vunpack.c.l.b16 %v237
  %v533 = vunpack.c.l.b16 %v238
  %v534 = vunpack.c.l.b16 %v239
  %v535 = vunpack.c.l.b16 %v240
  %v536 = vunpack.c.l.b16 %v241
  %v537 = vunpack.c.l.b16 %v242
  %v538 = vunpack.c.l.b16 %v243
  %v539 = vunpack.c.l.b16 %v244
  %v540 = vunpack.c.l.b16 %v245
  %v541 = vunpack.c.l.b16 %v246
  %v542 = vunpack.c.l.b16 %v247
  %v543 = vunpack.c.l.b16 %v248
  %v544 = vunpack.c.l.b16 %v249
  %v545 = vunpack.c.l.b16 %v250
  %v546 = vunpack.c.l.b16 %v251
  %v547 = vunpack.c.l.b16 %v252
  %v548 = vunpack.c.l.b16 %v253
  %v549 = vunpack.c.l.b16 %v254
  %v550 = vunpack.c.l.b16 %v255
  %v551 = vunpack.c.l.b16 %v256
  %v552 = vunpack.c.l.b16 %v257
  %v553 = vunpack.c.l.b16 %v258
  %v554 = vunpack.c.l.b16 %v259
  %v555 = vunpack.c.l.b16 %v260
  %v556 = vunpack.c.l.b16 %v261
  %v557 = vunpack.c.l.b16 %v262
  %v558 = vunpack.c.l.b16 %v263
  %v559 = vunpack.c.l.b16 %v264
  %v560 = vunpack.c.l.b16 %v265
  %v561 = vunpack.c.l.b16 %v266
  %v562 = vunpack.c.l.b16 %v267
  %v563 = vunpack.c.l.b16 %v268
  %v564 = vunpack.c.l.b16 %v269
  %v565 = vunpack.c.l.b16 %v270
  %v566 = vunpack.c.l.b16 %v271
  %v567 = vunpack.c.l.b16 %v272
  %v568 = vunpack.c.l.b16 %v273
  %v569 = vunpack.c.l.b16 %v274
  %v570 = vunpack.c.l.b16 %v275
  %v571 = vunpack.c.l.b16 %v276
  %v572 = vunpack.c.l.b16 %v277
  %v573 = vunpack.c.l.b16 %v278
  %v574 = vunpack.c.l.b16 %v279
  %v575 = vunpack.c.l.b16 %v280
  %v576 = vunpack.c.l.b16 %v281
  %v577 = vunpack.c.l.b16 %v282
  %v578 = vunpack.c.l.b16 %v283
  %v579 = vunpack.c.l.b16 %v284
  %v580 = vunpack.c.l.b16 %v285
  %v581 = vunpack.c.l.b16 %v286
  %v582 = vunpack.c.l.b16 %v287
  %v583 = vunpack.c.l.b16 %v288
  %v584 = vunpack.c.l.b16 %v289
  %v585 = vunpack.c.l.b16 %v290
  %v586 = vunpack.c.l.b16 %v291
  %v587 = vunpack.c.l.b16 %v292
  %v588 = vunpack.c.l.b16 %v293
  %v589 = vunpack.c.l.b16 %v294
  %v590 = vunpack.c.l.b16 %v295
  %v591 = vunpack.c.l.b16 %v296
  %v592 = vunpack.c.l.b16 %v297
  %v593 = vunpack.c.l.b16 %v298
  %v594 = vunpack.c.l.b16 %v299
  %v595 = vunpack.c.l.b16 %v300
  %v596 = vunpack.c.l.b16 %v301
  %v597 = vunpack.c.l.b16 %v302
  %v598 = vunpack.c.l.b16 %v303
  %v599 = vunpack.c.l.b16 %v304
  %v600 = vunpack.c.l.b16 %v305
  %v601 = vunpack.c.l.b16 %v306
  %v602 = vunpack.c.l.b16 %v307
  %v603 = vunpack.c.l.b16 %v308
  %v604 = vunpack.c.l.b16 %v309
  %v605 = vunpack.c.l.b16 %v310
  %v606 = vunpack.c.l.b16 %v311
  %v607 = vunpack.c.l.b16 %v312
  %v608 = vunpack.c.l.b16 %v313
  %v609 = vpack.c.b16 %v466, %v465
  %v610 = vpack.c.b16 %v468, %v467
  %v611 = vpack.c.b16 %v470, %v469
  %v612 = vpack.c.b16 %v472, %v471
  %v613 = vpack.c.b16 %v474, %v473
  %v614 = vpack.c.b16 %v476, %v475
  %v615 = vpack.c.b16 %v478, %v477
  %v616 = vpack.c.b16 %v480, %v479
  %v617 = vpack.c.b16 %v482, %v481
  %v618 = vpack.c.b16 %v484, %v483
  %v619 = vpack.c.b16 %v486, %v485
  %v620 = vpack.c.b16 %v488, %v487
  %v621 = vpack.c.b16 %v490, %v489
  %v622 = vpack.c.b16 %v492, %v491
  %v623 = vpack.c.b16 %v494, %v493
  %v624 = vpack.c.b16 %v496, %v495
  %v625 = vpack.c.b16 %v498, %v497
  %v626 = vpack.c.b16 %v500, %v499
  %v627 = vpack.c.b16 %v502, %v501
  %v628 = vpack.c.b16 %v504, %v503
  %v629 = vpack.c.b16 %v506, %v505
  %v630 = vpack.c.b16 %v508, %v507
  %v631 = vpack.c.b16 %v510, %v509
  %v632 = vpack.c.b16 %v512, %v511
  %v633 = vpack.c.b16 %v514, %v513
  %v634 = vpack.c.b16 %v516, %v515
  %v635 = vpack.c.b16 %v518, %v517
  %v636 = vpack.c.b16 %v520, %v519
  %v637 = vpack.c.b16 %v522, %v521
  %v638 = vpack.c.b16 %v524, %v523
  %v639 = vpack.c.b16 %v526, %v525
  %v640 = vpack.c.b16 %v528, %v527
  %v641 = vpack.c.b16 %v530, %v529
  %v642 = vpack.c.b16 %v532, %v531
  %v643 = vpack.c.b16 %v534, %v533
  %v644 = vpack.c.b16 %v536, %v535
  %v645 = vpack.c.b16 %v538, %v537
  %v646 = vpack.c.b16 %v540, %v539
  %v647 = vpack.c.b16 %v542, %v541
  %v648 = vpack.c.b16 %v544, %v543
  %v649 = vpack.c.b16 %v546, %v545
  %v650 = vpack.c.b16 %v548, %v547
  %v651 = vpack.c.b16 %v550, %v549
  %v652 = vpack.c.b16 %v552, %v551
  %v653 = vpack.c.b16 %v554, %v553
  %v654 = vpack.c.b16 %v556, %v555
  %v655 = vpack.c.b16 %v558, %v557
  %v656 = vpack.c.b16 %v560, %v559
  %v657 = vpack.c.b16 %v562, %v561
  %v658 = vpack.c.b16 %v564, %v563
  %v659 = vpack.c.b16 %v566, %v565
  %v660 = vpack.c.b16 %v568, %v567
  %v661 = vpack.c.b16 %v570, %v569
  %v662 = vpack.c.b16 %v572, %v571
  %v663 = vpack.c.b16 %v574, %v573
  %v664 = vpack.c.b16 %v576, %v575
  %v665 = vpack.c.b16 %v578, %v577
  %v666 = vpack.c.b16 %v580, %v579
  %v667 = vpack.c.b16 %v582, %v581
  %v668 = vpack.c.b16 %v584, %v583
  %v669 = vpack.c.b16 %v586, %v585
  %v670 = vpack.c.b16 %v588, %v587
  %v671 = vpack.c.b16 %v590, %v589
  %v672 = vpack.c.b16 %v592, %v591
  %v673 = vpack.c.b16 %v594, %v593
  %v674 = vpack.c.b16 %v596, %v595
  %v675 = vpack.c.b16 %v598, %v597
  %v676 = vpack.c.b16 %v600, %v599
  %v677 = vpack.c.b16 %v602, %v601
  %v678 = vpack.c.b16 %v604, %v603
  %v679 = vpack.c.b16 %v606, %v605
  %v680 = vpack.c.b16 %v608, %v607
  %753 = vmatprep.subr.bf16.mxu0 0
  %754 = vmatpush1.bf16.msra.mxu0 %v616
  %755 = vmatprep.subr.bf16.mxu0 0
  %756 = vmatpush1.bf16.msra.mxu0 %v615
  %757 = vmatprep.subr.bf16.mxu0 0
  %758 = vmatpush1.bf16.msra.mxu0 %v614
  %759 = vmatprep.subr.bf16.mxu0 0
  %760 = vmatpush1.bf16.msra.mxu0 %v613
  %761 = vmatprep.subr.bf16.mxu0 0
  %762 = vmatpush1.bf16.msra.mxu0 %v612
  %763 = vmatprep.subr.bf16.mxu0 0
  %764 = vmatpush1.bf16.msra.mxu0 %v611
  %765 = vmatprep.subr.bf16.mxu0 0
  %766 = vmatpush1.bf16.msra.mxu0 %v610
  %767 = vmatprep.subr.bf16.mxu0 0
  %768 = vmatpush1.bf16.msra.mxu0 %v609
  %769 = vmatprep.subr.bf16.mxu0 0
  %770 = vmatpush2.bf16.msra.mxu0 %v624
  %771 = vmatprep.subr.bf16.mxu0 0
  %772 = vmatpush2.bf16.msra.mxu0 %v623
  %773 = vmatprep.subr.bf16.mxu0 0
  %774 = vmatpush2.bf16.msra.mxu0 %v622
  %775 = vmatprep.subr.bf16.mxu0 0
  %776 = vmatpush2.bf16.msra.mxu0 %v621
  %777 = vmatprep.subr.bf16.mxu0 0
  %778 = vmatpush2.bf16.msra.mxu0 %v620
  %779 = vmatprep.subr.bf16.mxu0 0
  %780 = vmatpush2.bf16.msra.mxu0 %v619
  %781 = vmatprep.subr.bf16.mxu0 0
  %782 = vmatpush2.bf16.msra.mxu0 %v618
  %783 = vmatprep.subr.bf16.mxu0 0
  %784 = vmatpush2.bf16.msra.mxu0 %v617
  %785 = vmatprep.mubr.bf16.mxu0 %v153
  %786 = vmatmul.mubr.bf16.gmra.mxu0 %v152
  %v787 = vpop.f32.mrf.mxu0
  %v788 = vadd.f32 %v319, %v787
  %v789 = vpop.f32.mrf.mxu0
  %v790 = vpop.f32.mrf.mxu0
  %v791 = vadd.f32 %v319, %v790
  %v792 = vpop.f32.mrf.mxu0
  %793 = vmatprep.mubr.bf16.mxu0 %v162
  %794 = vmatmul.mubr.bf16.gmra.mxu0 %v161
  %v795 = vpop.f32.mrf.mxu0
  %v796 = vadd.f32 %v319, %v795
  %v797 = vpop.f32.mrf.mxu0
  %v798 = vpop.f32.mrf.mxu0
  %v799 = vadd.f32 %v319, %v798
  %v800 = vpop.f32.mrf.mxu0
  %801 = vdwg.mxu0
  %802 = vmatprep.subr.bf16.mxu0 0
  %803 = vmatpush1.bf16.msra.mxu0 %v632
  %804 = vmatprep.subr.bf16.mxu0 0
  %805 = vmatpush1.bf16.msra.mxu0 %v631
  %806 = vmatprep.subr.bf16.mxu0 0
  %807 = vmatpush1.bf16.msra.mxu0 %v630
  %808 = vmatprep.subr.bf16.mxu0 0
  %809 = vmatpush1.bf16.msra.mxu0 %v629
  %810 = vmatprep.subr.bf16.mxu0 0
  %811 = vmatpush1.bf16.msra.mxu0 %v628
  %812 = vmatprep.subr.bf16.mxu0 0
  %813 = vmatpush1.bf16.msra.mxu0 %v627
  %814 = vmatprep.subr.bf16.mxu0 0
  %815 = vmatpush1.bf16.msra.mxu0 %v626
  %816 = vmatprep.subr.bf16.mxu0 0
  %817 = vmatpush1.bf16.msra.mxu0 %v625
  %818 = vmatprep.subr.bf16.mxu0 0
  %819 = vmatpush2.bf16.msra.mxu0 %v640
  %820 = vmatprep.subr.bf16.mxu0 0
  %821 = vmatpush2.bf16.msra.mxu0 %v639
  %822 = vmatprep.subr.bf16.mxu0 0
  %823 = vmatpush2.bf16.msra.mxu0 %v638
  %824 = vmatprep.subr.bf16.mxu0 0
  %825 = vmatpush2.bf16.msra.mxu0 %v637
  %826 = vmatprep.subr.bf16.mxu0 0
  %827 = vmatpush2.bf16.msra.mxu0 %v636
  %828 = vmatprep.subr.bf16.mxu0 0
  %829 = vmatpush2.bf16.msra.mxu0 %v635
  %830 = vmatprep.subr.bf16.mxu0 0
  %831 = vmatpush2.bf16.msra.mxu0 %v634
  %832 = vmatprep.subr.bf16.mxu0 0
  %833 = vmatpush2.bf16.msra.mxu0 %v633
  %834 = vmatprep.mubr.bf16.mxu0 %v155
  %835 = vmatmul.mubr.bf16.gmra.mxu0 %v154
  %v836 = vpop.f32.mrf.mxu0
  %v837 = vadd.f32 %v788, %v836
  %v838 = vpop.f32.mrf.mxu0
  %v839 = vpop.f32.mrf.mxu0
  %v840 = vadd.f32 %v791, %v839
  %v841 = vpop.f32.mrf.mxu0
  %842 = vmatprep.mubr.bf16.mxu0 %v164
  %843 = vmatmul.mubr.bf16.gmra.mxu0 %v163
  %v844 = vpop.f32.mrf.mxu0
  %v845 = vadd.f32 %v796, %v844
  %v846 = vpop.f32.mrf.mxu0
  %v847 = vpop.f32.mrf.mxu0
  %v848 = vadd.f32 %v799, %v847
  %v849 = vpop.f32.mrf.mxu0
  %850 = vdwg.mxu0
  %851 = vmatprep.subr.bf16.mxu0 0
  %852 = vmatpush1.bf16.msra.mxu0 %v648
  %853 = vmatprep.subr.bf16.mxu0 0
  %854 = vmatpush1.bf16.msra.mxu0 %v647
  %855 = vmatprep.subr.bf16.mxu0 0
  %856 = vmatpush1.bf16.msra.mxu0 %v646
  %857 = vmatprep.subr.bf16.mxu0 0
  %858 = vmatpush1.bf16.msra.mxu0 %v645
  %859 = vmatprep.subr.bf16.mxu0 0
  %860 = vmatpush1.bf16.msra.mxu0 %v644
  %861 = vmatprep.subr.bf16.mxu0 0
  %862 = vmatpush1.bf16.msra.mxu0 %v643
  %863 = vmatprep.subr.bf16.mxu0 0
  %864 = vmatpush1.bf16.msra.mxu0 %v642
  %865 = vmatprep.subr.bf16.mxu0 0
  %866 = vmatpush1.bf16.msra.mxu0 %v641
  %867 = vmatprep.subr.bf16.mxu0 0
  %868 = vmatpush2.bf16.msra.mxu0 %v656
  %869 = vmatprep.subr.bf16.mxu0 0
  %870 = vmatpush2.bf16.msra.mxu0 %v655
  %871 = vmatprep.subr.bf16.mxu0 0
  %872 = vmatpush2.bf16.msra.mxu0 %v654
  %873 = vmatprep.subr.bf16.mxu0 0
  %874 = vmatpush2.bf16.msra.mxu0 %v653
  %875 = vmatprep.subr.bf16.mxu0 0
  %876 = vmatpush2.bf16.msra.mxu0 %v652
  %877 = vmatprep.subr.bf16.mxu0 0
  %878 = vmatpush2.bf16.msra.mxu0 %v651
  %879 = vmatprep.subr.bf16.mxu0 0
  %880 = vmatpush2.bf16.msra.mxu0 %v650
  %881 = vmatprep.subr.bf16.mxu0 0
  %882 = vmatpush2.bf16.msra.mxu0 %v649
  %883 = vmatprep.mubr.bf16.mxu0 %v157
  %884 = vmatmul.mubr.bf16.gmra.mxu0 %v156
  %v885 = vpop.f32.mrf.mxu0
  %v886 = vadd.f32 %v837, %v885
  %v887 = vpop.f32.mrf.mxu0
  %v888 = vpop.f32.mrf.mxu0
  %v889 = vadd.f32 %v840, %v888
  %v890 = vpop.f32.mrf.mxu0
  %891 = vmatprep.mubr.bf16.mxu0 %v166
  %892 = vmatmul.mubr.bf16.gmra.mxu0 %v165
  %v893 = vpop.f32.mrf.mxu0
  %v894 = vadd.f32 %v845, %v893
  %v895 = vpop.f32.mrf.mxu0
  %v896 = vpop.f32.mrf.mxu0
  %v897 = vadd.f32 %v848, %v896
  %v898 = vpop.f32.mrf.mxu0
  %899 = vdwg.mxu0
  %900 = vmatprep.subr.bf16.mxu0 0
  %901 = vmatpush1.bf16.msra.mxu0 %v664
  %902 = vmatprep.subr.bf16.mxu0 0
  %903 = vmatpush1.bf16.msra.mxu0 %v663
  %904 = vmatprep.subr.bf16.mxu0 0
  %905 = vmatpush1.bf16.msra.mxu0 %v662
  %906 = vmatprep.subr.bf16.mxu0 0
  %907 = vmatpush1.bf16.msra.mxu0 %v661
  %908 = vmatprep.subr.bf16.mxu0 0
  %909 = vmatpush1.bf16.msra.mxu0 %v660
  %910 = vmatprep.subr.bf16.mxu0 0
  %911 = vmatpush1.bf16.msra.mxu0 %v659
  %912 = vmatprep.subr.bf16.mxu0 0
  %913 = vmatpush1.bf16.msra.mxu0 %v658
  %914 = vmatprep.subr.bf16.mxu0 0
  %915 = vmatpush1.bf16.msra.mxu0 %v657
  %916 = vmatprep.subr.bf16.mxu0 0
  %917 = vmatpush2.bf16.msra.mxu0 %v672
  %918 = vmatprep.subr.bf16.mxu0 0
  %919 = vmatpush2.bf16.msra.mxu0 %v671
  %920 = vmatprep.subr.bf16.mxu0 0
  %921 = vmatpush2.bf16.msra.mxu0 %v670
  %922 = vmatprep.subr.bf16.mxu0 0
  %923 = vmatpush2.bf16.msra.mxu0 %v669
  %924 = vmatprep.subr.bf16.mxu0 0
  %925 = vmatpush2.bf16.msra.mxu0 %v668
  %926 = vmatprep.subr.bf16.mxu0 0
  %927 = vmatpush2.bf16.msra.mxu0 %v667
  %928 = vmatprep.subr.bf16.mxu0 0
  %929 = vmatpush2.bf16.msra.mxu0 %v666
  %930 = vmatprep.subr.bf16.mxu0 0
  %931 = vmatpush2.bf16.msra.mxu0 %v665
  %932 = vmatprep.mubr.bf16.mxu0 %v159
  %933 = vmatmul.mubr.bf16.gmra.mxu0 %v158
  %v934 = vpop.f32.mrf.mxu0
  %v935 = vadd.f32 %v886, %v934
  %v936 = vpop.f32.mrf.mxu0
  %v937 = vpop.f32.mrf.mxu0
  %v938 = vadd.f32 %v889, %v937
  %v939 = vpop.f32.mrf.mxu0
  %940 = vmatprep.mubr.bf16.mxu0 %v168
  %941 = vmatmul.mubr.bf16.gmra.mxu0 %v167
  %v942 = vpop.f32.mrf.mxu0
  %v943 = vadd.f32 %v894, %v942
  %v944 = vpop.f32.mrf.mxu0
  %v945 = vpop.f32.mrf.mxu0
  %v946 = vadd.f32 %v897, %v945
  %v947 = vpop.f32.mrf.mxu0
  %948 = vdwg.mxu0
  %949 = vmatprep.subr.bf16.mxu0 0
  %950 = vmatpush1.bf16.msra.mxu0 %v680
  %951 = vmatprep.subr.bf16.mxu0 0
  %952 = vmatpush1.bf16.msra.mxu0 %v679
  %953 = vmatprep.subr.bf16.mxu0 0
  %954 = vmatpush1.bf16.msra.mxu0 %v678
  %955 = vmatprep.subr.bf16.mxu0 0
  %956 = vmatpush1.bf16.msra.mxu0 %v677
  %957 = vmatprep.subr.bf16.mxu0 0
  %958 = vmatpush1.bf16.msra.mxu0 %v676
  %959 = vmatprep.subr.bf16.mxu0 0
  %960 = vmatpush1.bf16.msra.mxu0 %v675
  %961 = vmatprep.subr.bf16.mxu0 0
  %962 = vmatpush1.bf16.msra.mxu0 %v674
  %963 = vmatprep.subr.bf16.mxu0 0
  %964 = vmatpush1.bf16.msra.mxu0 %v673
  %965 = vmatprep.subr.bf16.mxu0 0
  %966 = vmatpush2.bf16.msra.mxu0 0
  %967 = vmatprep.subr.bf16.mxu0 0
  %968 = vmatpush2.bf16.msra.mxu0 0
  %969 = vmatprep.subr.bf16.mxu0 0
  %970 = vmatpush2.bf16.msra.mxu0 0
  %971 = vmatprep.subr.bf16.mxu0 0
  %972 = vmatpush2.bf16.msra.mxu0 0
  %973 = vmatprep.subr.bf16.mxu0 0
  %974 = vmatpush2.bf16.msra.mxu0 0
  %975 = vmatprep.subr.bf16.mxu0 0
  %976 = vmatpush2.bf16.msra.mxu0 0
  %977 = vmatprep.subr.bf16.mxu0 0
  %978 = vmatpush2.bf16.msra.mxu0 0
  %979 = vmatprep.subr.bf16.mxu0 0
  %980 = vmatpush2.bf16.msra.mxu0 0
  %981 = vmatprep.mubr.bf16.mxu0 0
  %982 = vmatmul.mubr.bf16.gmra.mxu0 %v160
  %v983 = vpop.f32.mrf.mxu0
  %v984 = vadd.f32 %v935, %v983
  %v985 = vpop.f32.mrf.mxu0
  %v986 = vpop.f32.mrf.mxu0
  %v987 = vadd.f32 %v938, %v986
  %v988 = vpop.f32.mrf.mxu0
  %989 = vmatprep.mubr.bf16.mxu0 0
  %990 = vmatmul.mubr.bf16.gmra.mxu0 %v169
  %v991 = vpop.f32.mrf.mxu0
  %v992 = vadd.f32 %v943, %v991
  %v993 = vpop.f32.mrf.mxu0
  %v994 = vpop.f32.mrf.mxu0
  %v995 = vadd.f32 %v946, %v994
  %v996 = vpop.f32.mrf.mxu0
  %997 = vdwg.mxu0
  %998 = vst [vmem:[%s3] sm:$0xff] %v984
  %999 = vst [vmem:[%s3 + $0x8] sm:$0xff] %v987
  %1000 = vst [vmem:[%s3 + $0x10] sm:$0xff] %v992
  %1001 = vst [vmem:[%s3 + $0x18] sm:$0xff] %v995
  // Predicated region
  $region14: #{oned_block_forward.1} parent=0 // pred_check
    _
  $region15: #{oned_block_forward.1} parent=0 // pred_check_branch
    %1003 = sbr.rel (0) target = $region17
  $region16: #{oned_block_forward.1} parent=0 // pred_region
    _
  $region17: #{oned_block_forward.1} parent=0 // pred_fallthru
    _
  // Predicated region
  $region18: #{oned_block_forward.1} parent=0 // pred_check
    _
  $region19: #{oned_block_forward.1} parent=0 // pred_check_branch
    %1005 = sbr.rel (0) target = $region21
  $region20: #{oned_block_forward.1} parent=0 // pred_region
    _
  $region21: #{oned_block_forward.1} parent=0 // pred_fallthru
    _

</llo_original>
